<compile_context>
chip_gen: v7x
topology: tpu7x:2x2x1
jax: 0.10.0
libtpu: 0.0.40
codegen_flags: <defaults>
</compile_context>

<pallas_src>
import math

import jax
import jax.numpy as jnp
from jax.experimental import pallas as pl
from jax.experimental.pallas import tpu as pltpu

LN_EPS = 1e-5
NEG_BIG = -1000000000.0


def _layernorm(x, gamma, beta):
    mu = jnp.mean(x, axis=-1, keepdims=True)
    var = jnp.mean((x - mu) ** 2, axis=-1, keepdims=True)
    return (x - mu) * jax.lax.rsqrt(var + LN_EPS) * gamma + beta


def _softmax(x, subtract_max=True):
    if subtract_max:
        x = x - jnp.max(x, axis=-1, keepdims=True)
    e = jnp.exp(x)
    # Exact divide keeps the output bit-close to the XLA reference; switch to
    # pl.reciprocal(..., approx=True) if ~2e-4 relative error is acceptable.
    return e / jnp.sum(e, axis=-1, keepdims=True)


def contrastive_attention_kernel(
    sent_ref,   # (Bb*S_s, D)  batch-stacked sentiments block
    emo_ref,    # (Bb*S_e, D)  batch-stacked emotions block
    mask_ref,   # (Bb, 1, S_s) key mask block (float32, 0 = masked)
    wq_ref,     # (D, D)       query weight (1/sqrt(D) pre-folded)
    wkv_ref,    # (D, 2D)      fused [Wk | Wv]
    vecs_ref,   # (16, D)      packed LN gammas/betas and biases
    out_ref,    # (Bb, S_e, D)
):
    D = sent_ref.shape[-1]
    Bb = mask_ref.shape[0]
    S_s = mask_ref.shape[2]
    S_e = emo_ref.shape[0] // Bb

    g_s, b_s = vecs_ref[0:1, :], vecs_ref[1:2, :]
    g_e, b_e = vecs_ref[2:3, :], vecs_ref[3:4, :]
    bq = vecs_ref[4:5, :]
    bk = vecs_ref[5:6, :]
    bv = vecs_ref[6:7, :]
    g_p, b_p = vecs_ref[7:8, :], vecs_ref[8:9, :]

    sent = sent_ref[...].astype(jnp.float32)
    emo = emo_ref[...].astype(jnp.float32)

    sent_n = _layernorm(sent, g_s, b_s)          # (Bb*S_s, D)
    emo_n = _layernorm(emo, g_e, b_e)            # (Bb*S_e, D)

    # Stacked projections: big-M matmuls on the MXU.
    q = jnp.dot(emo_n, wq_ref[...], preferred_element_type=jnp.float32) + bq
    kv = jnp.dot(sent_n, wkv_ref[...], preferred_element_type=jnp.float32)
    k = kv[:, :D] + bk
    v = kv[:, D:] + bv

    q3 = q.reshape(Bb, S_e, D)
    k3 = k.reshape(Bb, S_s, D)
    v3 = v.reshape(Bb, S_s, D)

    # Batched scores, contracting the last dim of both operands (no k.T).
    scores = jax.lax.dot_general(
        q3, k3, dimension_numbers=(((2,), (2,)), ((0,), (0,))),
        preferred_element_type=jnp.float32)      # (Bb, S_e, S_s)

    mask = mask_ref[...]                         # (Bb, 1, S_s) broadcasts over S_e
    scores = jnp.where(mask == 0.0, NEG_BIG, scores)

    attn = _softmax(scores, subtract_max=True)
    # Inputs of the second softmax are bounded in [0, 1]: skip the row max
    # (shift-invariant, exp can't overflow).  Matches PyTorch: no re-masking.
    contrastive = _softmax(1.0 - attn, subtract_max=False)
    # TODO(synk): nn.Dropout(0.1) is identity here (eval-mode forward).

    cv = jax.lax.dot_general(
        contrastive, v3, dimension_numbers=(((2,), (1,)), ((0,), (0,))),
        preferred_element_type=jnp.float32)      # (Bb, S_e, D)

    out_ref[...] = _layernorm(cv, g_p, b_p).astype(out_ref.dtype)


def _pick_batch_block(B, S_s, S_e, max_rows=2048):
    """Largest divisor of B whose blocks respect the sublane (8) tiling and
    keep the per-step VMEM row count modest."""
    for bb in range(B, 0, -1):
        if B % bb:
            continue
        if bb * max(S_s, S_e) > max_rows and bb != 1:
            continue
        ok_s = (bb * S_s) % 8 == 0 or bb == B
        ok_e = (bb * S_e) % 8 == 0 or bb == B
        if ok_s and ok_e:
            return bb
    return B


def contrastive_attention(sentiments, emotions, sentiments_masks, params,
                          batch_block=None):
    B, S_s, D = sentiments.shape
    _, S_e, _ = emotions.shape

    bb = batch_block or _pick_batch_block(B, S_s, S_e)
    assert B % bb == 0
    grid = (B // bb,)

    scale = 1.0 / math.sqrt(D)
    # Fold the 1/sqrt(D) score scale into the query projection.
    wq = params["wq"].astype(jnp.float32) * scale
    wkv = jnp.concatenate(
        [params["wk"].astype(jnp.float32), params["wv"].astype(jnp.float32)],
        axis=1)                                              # (D, 2D)

    vec_rows = jnp.stack(
        [params["g_s"], params["b_s"], params["g_e"], params["b_e"],
         params["bq"] * scale, params["bk"], params["bv"],
         params["g_p"], params["b_p"]],
        axis=0).astype(jnp.float32)                          # (9, D)
    vecs = jnp.zeros((16, D), jnp.float32).at[:9, :].set(vec_rows)

    sent2 = sentiments.reshape(B * S_s, D).astype(jnp.float32)
    emo2 = emotions.reshape(B * S_e, D).astype(jnp.float32)
    mask3 = sentiments_masks.reshape(B, 1, S_s).astype(jnp.float32)

    flops = 2 * B * (S_e * D * D + 2 * S_s * D * D + 2 * S_e * S_s * D)
    bytes_accessed = 4 * (2 * B * S_s * D + 2 * B * S_e * D + B * S_s
                          + 3 * D * D + 16 * D)
    cost = pl.CostEstimate(flops=flops,
                           transcendentals=2 * B * S_e * S_s,
                           bytes_accessed=bytes_accessed)

    out = pl.pallas_call(
        contrastive_attention_kernel,
        out_shape=jax.ShapeDtypeStruct((B, S_e, D), jnp.float32),
        grid_spec=pltpu.PrefetchScalarGridSpec(
            num_scalar_prefetch=0,
            grid=grid,
            in_specs=[
                pl.BlockSpec((bb * S_s, D), lambda b: (b, 0)),      # sentiments
                pl.BlockSpec((bb * S_e, D), lambda b: (b, 0)),      # emotions
                pl.BlockSpec((bb, 1, S_s), lambda b: (b, 0, 0)),    # mask
                pl.BlockSpec((D, D), lambda b: (0, 0)),             # Wq (scaled)
                pl.BlockSpec((D, 2 * D), lambda b: (0, 0)),         # [Wk|Wv]
                pl.BlockSpec((16, D), lambda b: (0, 0)),            # packed vecs
            ],
            out_specs=pl.BlockSpec((bb, S_e, D), lambda b: (b, 0, 0)),
        ),
        compiler_params=pltpu.CompilerParams(
            dimension_semantics=("parallel",)),
        cost_estimate=cost,
    )(sent2, emo2, mask3, wq, wkv, vecs)

    return out


def reference_jax(sentiments, emotions, mask, p):
    def ln(x, g, b):
        mu = jnp.mean(x, axis=-1, keepdims=True)
        var = jnp.mean((x - mu) ** 2, axis=-1, keepdims=True)
        return (x - mu) / jnp.sqrt(var + LN_EPS) * g + b

    D = sentiments.shape[-1]
    s = ln(sentiments, p["g_s"], p["b_s"])
    e = ln(emotions, p["g_e"], p["b_e"])
    q = e @ p["wq"] + p["bq"]
    k = s @ p["wk"] + p["bk"]
    v = s @ p["wv"] + p["bv"]
    scores = jnp.einsum("bqd,bkd->bqk", q, k) / D ** 0.5
    scores = jnp.where(mask[:, None, :] == 0, NEG_BIG, scores)
    attn = jax.nn.softmax(scores, axis=-1)
    cw = jax.nn.softmax(1.0 - attn, axis=-1)
    cv = jnp.einsum("bqk,bkd->bqd", cw, v)
    return ln(cv, p["g_p"], p["b_p"])


if __name__ == "__main__":
    B, S_s, S_e, D = 2, 8, 8, 32

    key = jax.random.PRNGKey(0)
    ks = jax.random.split(key, 10)

    sentiments = jax.random.normal(ks[0], (B, S_s, D), dtype=jnp.float32)
    emotions = jax.random.normal(ks[1], (B, S_e, D), dtype=jnp.float32)
    sentiments_masks = (jax.random.uniform(ks[2], (B, S_s)) > 0.25).astype(jnp.int32)
    sentiments_masks = sentiments_masks.at[:, 0].set(1)  # at least one valid key

    scale = 1.0 / jnp.sqrt(D)
    params = {
        # LayerNorm params
        "g_s": jnp.ones((D,), jnp.float32), "b_s": jnp.zeros((D,), jnp.float32),
        "g_e": jnp.ones((D,), jnp.float32), "b_e": jnp.zeros((D,), jnp.float32),
        "g_p": jnp.ones((D,), jnp.float32), "b_p": jnp.zeros((D,), jnp.float32),
        # Linear params stored as (in, out) so the kernel does x @ W + b
        "wq": jax.random.normal(ks[3], (D, D), jnp.float32) * scale,
        "bq": jax.random.normal(ks[4], (D,), jnp.float32) * 0.01,
        "wk": jax.random.normal(ks[5], (D, D), jnp.float32) * scale,
        "bk": jax.random.normal(ks[6], (D,), jnp.float32) * 0.01,
        "wv": jax.random.normal(ks[7], (D, D), jnp.float32) * scale,
        "bv": jax.random.normal(ks[8], (D,), jnp.float32) * 0.01,
    }

    out = contrastive_attention(sentiments, emotions, sentiments_masks, params)
    out = jax.block_until_ready(out)

    ref = reference_jax(sentiments, emotions, sentiments_masks, params)
    assert out.shape == (B, S_e, D)
    err = float(jnp.max(jnp.abs(out - ref)))
    assert jnp.allclose(out, ref, atol=2e-4, rtol=2e-4), err
    print("KERNEL_OK")
</pallas_src>

<mosaic_0001>
module attributes {stable_mosaic.version = 11 : i64} {
  func.func @contrastive_attention_kernel(%arg0: i32, %arg1: memref<16x32xf32, #tpu.memory_space<vmem>>, %arg2: memref<16x32xf32, #tpu.memory_space<vmem>>, %arg3: memref<2x1x8xf32, #tpu.memory_space<vmem>>, %arg4: memref<32x32xf32, #tpu.memory_space<vmem>>, %arg5: memref<32x64xf32, #tpu.memory_space<vmem>>, %arg6: memref<16x32xf32, #tpu.memory_space<vmem>>, %arg7: memref<2x8x32xf32, #tpu.memory_space<vmem>>) attributes {dimension_semantics = [#tpu.dimension_semantics<parallel>], iteration_bounds = array<i64: 1>, scalar_prefetch = 0 : i64, scratch_operands = 0 : i64, tpu.core_type = #tpu.core_type<tc>, window_params = [{transform_indices = @transform_0, window_bounds = array<i64: 16, 32>}, {transform_indices = @transform_1, window_bounds = array<i64: 16, 32>}, {transform_indices = @transform_2, window_bounds = array<i64: 2, 1, 8>}, {pipeline_mode = #tpu.pipeline_mode<synchronous>, transform_indices = @transform_3, window_bounds = array<i64: 32, 32>}, {pipeline_mode = #tpu.pipeline_mode<synchronous>, transform_indices = @transform_4, window_bounds = array<i64: 32, 64>}, {pipeline_mode = #tpu.pipeline_mode<synchronous>, transform_indices = @transform_5, window_bounds = array<i64: 16, 32>}, {transform_indices = @transform_6, window_bounds = array<i64: 2, 8, 32>}]} {
    %c0 = arith.constant 0 : index
    %c0_0 = arith.constant 0 : index
    %0 = vector.load %arg6[%c0, %c0_0] : memref<16x32xf32, #tpu.memory_space<vmem>>, vector<1x32xf32>
    %c1 = arith.constant 1 : index
    %c0_1 = arith.constant 0 : index
    %1 = vector.load %arg6[%c1, %c0_1] : memref<16x32xf32, #tpu.memory_space<vmem>>, vector<1x32xf32>
    %c2 = arith.constant 2 : index
    %c0_2 = arith.constant 0 : index
    %2 = vector.load %arg6[%c2, %c0_2] : memref<16x32xf32, #tpu.memory_space<vmem>>, vector<1x32xf32>
    %c3 = arith.constant 3 : index
    %c0_3 = arith.constant 0 : index
    %3 = vector.load %arg6[%c3, %c0_3] : memref<16x32xf32, #tpu.memory_space<vmem>>, vector<1x32xf32>
    %c4 = arith.constant 4 : index
    %c0_4 = arith.constant 0 : index
    %4 = vector.load %arg6[%c4, %c0_4] : memref<16x32xf32, #tpu.memory_space<vmem>>, vector<1x32xf32>
    %c5 = arith.constant 5 : index
    %c0_5 = arith.constant 0 : index
    %5 = vector.load %arg6[%c5, %c0_5] : memref<16x32xf32, #tpu.memory_space<vmem>>, vector<1x32xf32>
    %c6 = arith.constant 6 : index
    %c0_6 = arith.constant 0 : index
    %6 = vector.load %arg6[%c6, %c0_6] : memref<16x32xf32, #tpu.memory_space<vmem>>, vector<1x32xf32>
    %c7 = arith.constant 7 : index
    %c0_7 = arith.constant 0 : index
    %7 = vector.load %arg6[%c7, %c0_7] : memref<16x32xf32, #tpu.memory_space<vmem>>, vector<1x32xf32>
    %c8 = arith.constant 8 : index
    %c0_8 = arith.constant 0 : index
    %8 = vector.load %arg6[%c8, %c0_8] : memref<16x32xf32, #tpu.memory_space<vmem>>, vector<1x32xf32>
    %c0_9 = arith.constant 0 : index
    %c0_10 = arith.constant 0 : index
    %9 = vector.load %arg1[%c0_9, %c0_10] : memref<16x32xf32, #tpu.memory_space<vmem>>, vector<16x32xf32>
    %c0_11 = arith.constant 0 : index
    %c0_12 = arith.constant 0 : index
    %10 = vector.load %arg2[%c0_11, %c0_12] : memref<16x32xf32, #tpu.memory_space<vmem>>, vector<16x32xf32>
    %cst = arith.constant dense<0.000000e+00> : vector<16xf32>
    %11 = vector.multi_reduction <add>, %9, %cst [1] : vector<16x32xf32> to vector<16xf32>
    %12 = vector.shape_cast %11 : vector<16xf32> to vector<16x1xf32>
    %cst_13 = arith.constant 3.200000e+01 : f32
    %13 = vector.broadcast %cst_13 : f32 to vector<16x1xf32>
    %14 = arith.divf %12, %13 : vector<16x1xf32>
    %15 = vector.broadcast %14 : vector<16x1xf32> to vector<16x32xf32>
    %16 = arith.subf %9, %15 : vector<16x32xf32>
    %17 = arith.mulf %16, %16 : vector<16x32xf32>
    %cst_14 = arith.constant dense<0.000000e+00> : vector<16xf32>
    %18 = vector.multi_reduction <add>, %17, %cst_14 [1] : vector<16x32xf32> to vector<16xf32>
    %19 = vector.shape_cast %18 : vector<16xf32> to vector<16x1xf32>
    %cst_15 = arith.constant 3.200000e+01 : f32
    %20 = vector.broadcast %cst_15 : f32 to vector<16x1xf32>
    %21 = arith.divf %19, %20 : vector<16x1xf32>
    %22 = vector.broadcast %14 : vector<16x1xf32> to vector<16x32xf32>
    %23 = arith.subf %9, %22 : vector<16x32xf32>
    %cst_16 = arith.constant 9.99999974E-6 : f32
    %24 = vector.broadcast %cst_16 : f32 to vector<16x1xf32>
    %25 = arith.addf %21, %24 : vector<16x1xf32>
    %26 = math.rsqrt %25 : vector<16x1xf32>
    %27 = vector.broadcast %26 : vector<16x1xf32> to vector<16x32xf32>
    %28 = arith.mulf %23, %27 : vector<16x32xf32>
    %29 = vector.broadcast %0 : vector<1x32xf32> to vector<16x32xf32>
    %30 = arith.mulf %28, %29 : vector<16x32xf32>
    %31 = vector.broadcast %1 : vector<1x32xf32> to vector<16x32xf32>
    %32 = arith.addf %30, %31 : vector<16x32xf32>
    %cst_17 = arith.constant dense<0.000000e+00> : vector<16xf32>
    %33 = vector.multi_reduction <add>, %10, %cst_17 [1] : vector<16x32xf32> to vector<16xf32>
    %34 = vector.shape_cast %33 : vector<16xf32> to vector<16x1xf32>
    %cst_18 = arith.constant 3.200000e+01 : f32
    %35 = vector.broadcast %cst_18 : f32 to vector<16x1xf32>
    %36 = arith.divf %34, %35 : vector<16x1xf32>
    %37 = vector.broadcast %36 : vector<16x1xf32> to vector<16x32xf32>
    %38 = arith.subf %10, %37 : vector<16x32xf32>
    %39 = arith.mulf %38, %38 : vector<16x32xf32>
    %cst_19 = arith.constant dense<0.000000e+00> : vector<16xf32>
    %40 = vector.multi_reduction <add>, %39, %cst_19 [1] : vector<16x32xf32> to vector<16xf32>
    %41 = vector.shape_cast %40 : vector<16xf32> to vector<16x1xf32>
    %cst_20 = arith.constant 3.200000e+01 : f32
    %42 = vector.broadcast %cst_20 : f32 to vector<16x1xf32>
    %43 = arith.divf %41, %42 : vector<16x1xf32>
    %44 = vector.broadcast %36 : vector<16x1xf32> to vector<16x32xf32>
    %45 = arith.subf %10, %44 : vector<16x32xf32>
    %cst_21 = arith.constant 9.99999974E-6 : f32
    %46 = vector.broadcast %cst_21 : f32 to vector<16x1xf32>
    %47 = arith.addf %43, %46 : vector<16x1xf32>
    %48 = math.rsqrt %47 : vector<16x1xf32>
    %49 = vector.broadcast %48 : vector<16x1xf32> to vector<16x32xf32>
    %50 = arith.mulf %45, %49 : vector<16x32xf32>
    %51 = vector.broadcast %2 : vector<1x32xf32> to vector<16x32xf32>
    %52 = arith.mulf %50, %51 : vector<16x32xf32>
    %53 = vector.broadcast %3 : vector<1x32xf32> to vector<16x32xf32>
    %54 = arith.addf %52, %53 : vector<16x32xf32>
    %c0_22 = arith.constant 0 : index
    %c0_23 = arith.constant 0 : index
    %55 = vector.load %arg4[%c0_22, %c0_23] : memref<32x32xf32, #tpu.memory_space<vmem>>, vector<32x32xf32>
    %cst_24 = arith.constant dense<0.000000e+00> : vector<16x32xf32>
    %56 = tpu.matmul %54, %55, %cst_24 {dimension_numbers = #tpu.dot_dimension_numbers<[1], [0], [0], [1], [0, 0, 1, 1], [], []>} : vector<16x32xf32>, vector<32x32xf32>, vector<16x32xf32> -> vector<16x32xf32>
    %57 = vector.broadcast %4 : vector<1x32xf32> to vector<16x32xf32>
    %58 = arith.addf %56, %57 : vector<16x32xf32>
    %c0_25 = arith.constant 0 : index
    %c0_26 = arith.constant 0 : index
    %59 = vector.load %arg5[%c0_25, %c0_26] : memref<32x64xf32, #tpu.memory_space<vmem>>, vector<32x64xf32>
    %cst_27 = arith.constant dense<0.000000e+00> : vector<16x64xf32>
    %60 = tpu.matmul %32, %59, %cst_27 {dimension_numbers = #tpu.dot_dimension_numbers<[1], [0], [0], [1], [0, 0, 1, 1], [], []>} : vector<16x32xf32>, vector<32x64xf32>, vector<16x64xf32> -> vector<16x64xf32>
    %61 = vector.extract_strided_slice %60 {offsets = [0, 0], sizes = [16, 32], strides = [1, 1]} : vector<16x64xf32> to vector<16x32xf32>
    %62 = vector.broadcast %5 : vector<1x32xf32> to vector<16x32xf32>
    %63 = arith.addf %61, %62 : vector<16x32xf32>
    %64 = vector.extract_strided_slice %60 {offsets = [0, 32], sizes = [16, 32], strides = [1, 1]} : vector<16x64xf32> to vector<16x32xf32>
    %65 = vector.broadcast %6 : vector<1x32xf32> to vector<16x32xf32>
    %66 = arith.addf %64, %65 : vector<16x32xf32>
    %67 = vector.shape_cast %58 : vector<16x32xf32> to vector<2x8x32xf32>
    %68 = vector.shape_cast %63 : vector<16x32xf32> to vector<2x8x32xf32>
    %69 = vector.shape_cast %66 : vector<16x32xf32> to vector<2x8x32xf32>
    %cst_28 = arith.constant dense<0.000000e+00> : vector<2x8x8xf32>
    %70 = tpu.matmul %67, %68, %cst_28 {dimension_numbers = #tpu.dot_dimension_numbers<[2], [2], [1], [1], [0, 0, 0, 1, 1, 1], [0], [0]>} : vector<2x8x32xf32>, vector<2x8x32xf32>, vector<2x8x8xf32> -> vector<2x8x8xf32>
    %c0_29 = arith.constant 0 : index
    %c0_30 = arith.constant 0 : index
    %c0_31 = arith.constant 0 : index
    %71 = vector.load %arg3[%c0_29, %c0_30, %c0_31] : memref<2x1x8xf32, #tpu.memory_space<vmem>>, vector<2x1x8xf32>
    %cst_32 = arith.constant 0.000000e+00 : f32
    %72 = vector.broadcast %cst_32 : f32 to vector<2x1x8xf32>
    %73 = arith.cmpf oeq, %71, %72 : vector<2x1x8xf32>
    %cst_33 = arith.constant -1.000000e+09 : f32
    %74 = vector.shape_cast %73 : vector<2x1x8xi1> to vector<2x1x8xi1>
    %75 = vector.broadcast %74 : vector<2x1x8xi1> to vector<2x8x8xi1>
    %76 = vector.broadcast %cst_33 : f32 to vector<2x8x8xf32>
    %77 = arith.select %75, %76, %70 : vector<2x8x8xi1>, vector<2x8x8xf32>
    %cst_34 = arith.constant dense<0xFF800000> : vector<2x8xf32>
    %78 = vector.multi_reduction <maximumf>, %77, %cst_34 [2] : vector<2x8x8xf32> to vector<2x8xf32>
    %79 = vector.shape_cast %78 : vector<2x8xf32> to vector<2x8x1xf32>
    %80 = vector.broadcast %79 : vector<2x8x1xf32> to vector<2x8x8xf32>
    %81 = arith.subf %77, %80 : vector<2x8x8xf32>
    %82 = math.exp %81 : vector<2x8x8xf32>
    %cst_35 = arith.constant dense<0.000000e+00> : vector<2x8xf32>
    %83 = vector.multi_reduction <add>, %82, %cst_35 [2] : vector<2x8x8xf32> to vector<2x8xf32>
    %84 = vector.shape_cast %83 : vector<2x8xf32> to vector<2x8x1xf32>
    %85 = vector.broadcast %84 : vector<2x8x1xf32> to vector<2x8x8xf32>
    %86 = arith.divf %82, %85 : vector<2x8x8xf32>
    %cst_36 = arith.constant 1.000000e+00 : f32
    %87 = vector.broadcast %cst_36 : f32 to vector<2x8x8xf32>
    %88 = arith.subf %87, %86 : vector<2x8x8xf32>
    %89 = math.exp %88 : vector<2x8x8xf32>
    %cst_37 = arith.constant dense<0.000000e+00> : vector<2x8xf32>
    %90 = vector.multi_reduction <add>, %89, %cst_37 [2] : vector<2x8x8xf32> to vector<2x8xf32>
    %91 = vector.shape_cast %90 : vector<2x8xf32> to vector<2x8x1xf32>
    %92 = vector.broadcast %91 : vector<2x8x1xf32> to vector<2x8x8xf32>
    %93 = arith.divf %89, %92 : vector<2x8x8xf32>
    %cst_38 = arith.constant dense<0.000000e+00> : vector<2x8x32xf32>
    %94 = tpu.matmul %93, %69, %cst_38 {dimension_numbers = #tpu.dot_dimension_numbers<[2], [1], [1], [2], [0, 0, 0, 1, 1, 2], [0], [0]>} : vector<2x8x8xf32>, vector<2x8x32xf32>, vector<2x8x32xf32> -> vector<2x8x32xf32>
    %cst_39 = arith.constant dense<0.000000e+00> : vector<2x8xf32>
    %95 = vector.multi_reduction <add>, %94, %cst_39 [2] : vector<2x8x32xf32> to vector<2x8xf32>
    %96 = vector.shape_cast %95 : vector<2x8xf32> to vector<2x8x1xf32>
    %cst_40 = arith.constant 3.200000e+01 : f32
    %97 = vector.broadcast %cst_40 : f32 to vector<2x8x1xf32>
    %98 = arith.divf %96, %97 : vector<2x8x1xf32>
    %99 = vector.broadcast %98 : vector<2x8x1xf32> to vector<2x8x32xf32>
    %100 = arith.subf %94, %99 : vector<2x8x32xf32>
    %101 = arith.mulf %100, %100 : vector<2x8x32xf32>
    %cst_41 = arith.constant dense<0.000000e+00> : vector<2x8xf32>
    %102 = vector.multi_reduction <add>, %101, %cst_41 [2] : vector<2x8x32xf32> to vector<2x8xf32>
    %103 = vector.shape_cast %102 : vector<2x8xf32> to vector<2x8x1xf32>
    %cst_42 = arith.constant 3.200000e+01 : f32
    %104 = vector.broadcast %cst_42 : f32 to vector<2x8x1xf32>
    %105 = arith.divf %103, %104 : vector<2x8x1xf32>
    %106 = vector.broadcast %98 : vector<2x8x1xf32> to vector<2x8x32xf32>
    %107 = arith.subf %94, %106 : vector<2x8x32xf32>
    %cst_43 = arith.constant 9.99999974E-6 : f32
    %108 = vector.broadcast %cst_43 : f32 to vector<2x8x1xf32>
    %109 = arith.addf %105, %108 : vector<2x8x1xf32>
    %110 = math.rsqrt %109 : vector<2x8x1xf32>
    %111 = vector.broadcast %110 : vector<2x8x1xf32> to vector<2x8x32xf32>
    %112 = arith.mulf %107, %111 : vector<2x8x32xf32>
    %113 = vector.shape_cast %7 : vector<1x32xf32> to vector<1x1x32xf32>
    %114 = vector.broadcast %113 : vector<1x1x32xf32> to vector<2x8x32xf32>
    %115 = arith.mulf %112, %114 : vector<2x8x32xf32>
    %116 = vector.shape_cast %8 : vector<1x32xf32> to vector<1x1x32xf32>
    %117 = vector.broadcast %116 : vector<1x1x32xf32> to vector<2x8x32xf32>
    %118 = arith.addf %115, %117 : vector<2x8x32xf32>
    %c0_44 = arith.constant 0 : index
    %c0_45 = arith.constant 0 : index
    %c0_46 = arith.constant 0 : index
    %119 = vector.load %arg7[%c0_44, %c0_45, %c0_46] : memref<2x8x32xf32, #tpu.memory_space<vmem>>, vector<2x8x32xf32>
    tpu.vector_store %arg7[%c0_44, %c0_45, %c0_46], %118 {strides = array<i32>} : memref<2x8x32xf32, #tpu.memory_space<vmem>>, vector<2x8x32xf32>,
    return
  }
  func.func @transform_0(%arg0: i32) -> (i32, i32) {
    %c0_i32 = arith.constant 0 : i32
    %c0_i32_0 = arith.constant 0 : i32
    return %arg0, %c0_i32 : i32, i32
  }
  func.func @transform_1(%arg0: i32) -> (i32, i32) {
    %c0_i32 = arith.constant 0 : i32
    %c0_i32_0 = arith.constant 0 : i32
    return %arg0, %c0_i32 : i32, i32
  }
  func.func @transform_2(%arg0: i32) -> (i32, i32, i32) {
    %c0_i32 = arith.constant 0 : i32
    %c0_i32_0 = arith.constant 0 : i32
    %c0_i32_1 = arith.constant 0 : i32
    return %arg0, %c0_i32, %c0_i32_0 : i32, i32, i32
  }
  func.func @transform_3(%arg0: i32) -> (i32, i32) {
    %c0_i32 = arith.constant 0 : i32
    %c0_i32_0 = arith.constant 0 : i32
    %c0_i32_1 = arith.constant 0 : i32
    return %c0_i32, %c0_i32_0 : i32, i32
  }
  func.func @transform_4(%arg0: i32) -> (i32, i32) {
    %c0_i32 = arith.constant 0 : i32
    %c0_i32_0 = arith.constant 0 : i32
    %c0_i32_1 = arith.constant 0 : i32
    return %c0_i32, %c0_i32_0 : i32, i32
  }
  func.func @transform_5(%arg0: i32) -> (i32, i32) {
    %c0_i32 = arith.constant 0 : i32
    %c0_i32_0 = arith.constant 0 : i32
    %c0_i32_1 = arith.constant 0 : i32
    return %c0_i32, %c0_i32_0 : i32, i32
  }
  func.func @transform_6(%arg0: i32) -> (i32, i32, i32) {
    %c0_i32 = arith.constant 0 : i32
    %c0_i32_0 = arith.constant 0 : i32
    %c0_i32_1 = arith.constant 0 : i32
    return %arg0, %c0_i32, %c0_i32_0 : i32, i32, i32
  }
}

</mosaic_0001>

<llo_original>
// kernel: tpu_custom_call.1
$region0: #{tpu_custom_call.1}
  #allocation0 [shape = 'u32[]', space=smem, size = 0x4, offset = 0x4, fixed_abs, tag = 'smem constant byte address 0x4 - core index']
  #allocation1 [shape = 'u32[144,128]{1,0:T(1,128)}', space=vmem, size = 0x12000, scoped, tag = 'internal scratch']
  %s0 = inlined_call_operand.hbm [shape: f32[16,32], index: 0, kind: input, shape index: {}]
  %s1 = inlined_call_operand.hbm [shape: f32[16,32], index: 1, kind: input, shape index: {}]
  %s2 = inlined_call_operand.vmem [shape: f32[2,1,8], index: 2, kind: input, shape index: {}]
  %s3 = inlined_call_operand.hbm [shape: f32[32,32], index: 3, kind: input, shape index: {}]
  %s4 = inlined_call_operand.hbm [shape: f32[32,64], index: 4, kind: input, shape index: {}]
  %s5 = inlined_call_operand.vmem [shape: f32[16,32], index: 5, kind: input, shape index: {}]
  %s6 = inlined_call_operand.hbm [shape: f32[2,8,32], index: 6, kind: output, shape index: {}]
  %s7 = sld [smem:[#allocation0]]
  $region50: #{tpu_custom_call.1} parent=0
    _
  %s9 = ssub.s32 1, %s7
  %s10 = scalar_select 0, %s9, %s7
  $region1: #{tpu_custom_call.1} parent=0
    #allocation2 [shape = 'u8[8192]{0}', space=vmem, size = 0x2000, scoped, tag = 'input window, operand 0, single buffered']
    #allocation3 [shape = 's32[1]{0}', space=sflag, size = 0x4, scoped, tag = 'scoped memory for tpu_custom_call.1']
    #allocation4 [shape = 's32[1]{0}', space=sflag, size = 0x4, scoped, tag = 'scoped memory for tpu_custom_call.1']
    #allocation5 [shape = 'u8[8192]{0}', space=vmem, size = 0x2000, scoped, tag = 'input window, operand 1, single buffered']
    #allocation6 [shape = 's32[1]{0}', space=sflag, size = 0x4, scoped, tag = 'scoped memory for tpu_custom_call.1']
    #allocation7 [shape = 'u8[16384]{0}', space=vmem, size = 0x4000, scoped, tag = 'input window, operand 3, single buffered']
    #allocation8 [shape = 'u8[16384]{0}', space=vmem, size = 0x4000, scoped, tag = 'input window, operand 4, single buffered']
    #allocation9 [shape = 's32[1]{0}', space=sflag, size = 0x4, scoped, tag = 'scoped memory for tpu_custom_call.1']
    #allocation10 [shape = 'u8[8192]{0}', space=vmem, size = 0x2000, scoped, tag = 'output window, operand 0, single buffered']
    %11 = vsyncpa [#allocation3], 0
    %12 = vsyncpa [#allocation6], 0
    %13 = vsyncpa [#allocation9], 0
    %14 = vsyncpa [#allocation4], 0
    // Predicated region
    $region2: #{tpu_custom_call.1} parent=1 // pred_check
      _
    $region3: #{tpu_custom_call.1} parent=1 // pred_check_branch
      %16 = sbr.rel (0) target = $region5
    $region4: #{tpu_custom_call.1} parent=1 // pred_region
      %s18 = ssub.s32 256, 256
      %19 = vsyncadd [#allocation3], %s18
      %s20 = sshll.u32 [#allocation2], 4
      %s21 = int_to_ptr.vmem [resolvable:$true] %s20
      %26 = dma.hbm_to_vmem [thread:$0]  %s0, 256, %s21, [#allocation3], 128, 128, 8
    $region5: #{tpu_custom_call.1} parent=1 // pred_fallthru
      _
    // Predicated region
    $region6: #{tpu_custom_call.1} parent=1 // pred_check
      _
    $region7: #{tpu_custom_call.1} parent=1 // pred_check_branch
      %28 = sbr.rel (0) target = $region9
    $region8: #{tpu_custom_call.1} parent=1 // pred_region
      %s30 = ssub.s32 256, 256
      %31 = vsyncadd [#allocation6], %s30
      %s32 = sshll.u32 [#allocation5], 4
      %s33 = int_to_ptr.vmem [resolvable:$true] %s32
      %38 = dma.hbm_to_vmem [thread:$0]  %s1, 256, %s33, [#allocation6], 128, 128, 8
    $region9: #{tpu_custom_call.1} parent=1 // pred_fallthru
      _
    // Predicated region
    $region10: #{tpu_custom_call.1} parent=1 // pred_check
      _
    $region11: #{tpu_custom_call.1} parent=1 // pred_check_branch
      %40 = sbr.rel (0) target = $region13
    $region12: #{tpu_custom_call.1} parent=1 // pred_region
      _
    $region13: #{tpu_custom_call.1} parent=1 // pred_fallthru
      _
    // Predicated region
    $region14: #{tpu_custom_call.1} parent=1 // pred_check
      _
    $region15: #{tpu_custom_call.1} parent=1 // pred_check_branch
      %42 = sbr.rel (0) target = $region17
    $region16: #{tpu_custom_call.1} parent=1 // pred_region
      %s44 = ssub.s32 512, 512
      %45 = vsyncadd [#allocation6], %s44
      %s46 = sshll.u32 [#allocation7], 4
      %s47 = int_to_ptr.vmem [resolvable:$true] %s46
      %52 = dma.hbm_to_vmem [thread:$0]  %s3, 512, %s47, [#allocation6], 128, 128, 8
    $region17: #{tpu_custom_call.1} parent=1 // pred_fallthru
      _
    // Predicated region
    $region18: #{tpu_custom_call.1} parent=1 // pred_check
      _
    $region19: #{tpu_custom_call.1} parent=1 // pred_check_branch
      %54 = sbr.rel (0) target = $region21
    $region20: #{tpu_custom_call.1} parent=1 // pred_region
      %s56 = ssub.s32 512, 512
      %57 = vsyncadd [#allocation9], %s56
      %s58 = sshll.u32 [#allocation8], 4
      %s59 = int_to_ptr.vmem [resolvable:$true] %s58
      %64 = dma.hbm_to_vmem [thread:$0]  %s4, 512, %s59, [#allocation9], 128, 128, 8
    $region21: #{tpu_custom_call.1} parent=1 // pred_fallthru
      _
    // Predicated region
    $region22: #{tpu_custom_call.1} parent=1 // pred_check
      _
    $region23: #{tpu_custom_call.1} parent=1 // pred_check_branch
      %66 = sbr.rel (0) target = $region25
    $region24: #{tpu_custom_call.1} parent=1 // pred_region
      _
    $region25: #{tpu_custom_call.1} parent=1 // pred_fallthru
      _
    // Predicated region
    $region26: #{tpu_custom_call.1} parent=1 // pred_check
      _
    $region27: #{tpu_custom_call.1} parent=1 // pred_check_branch
      %68 = sbr.rel (0) target = $region29
    $region28: #{tpu_custom_call.1} parent=1 // pred_region
      %69 = dma.done [#allocation3], 256
    $region29: #{tpu_custom_call.1} parent=1 // pred_fallthru
      _
    // Predicated region
    $region30: #{tpu_custom_call.1} parent=1 // pred_check
      _
    $region31: #{tpu_custom_call.1} parent=1 // pred_check_branch
      %71 = sbr.rel (0) target = $region33
    $region32: #{tpu_custom_call.1} parent=1 // pred_region
      %72 = dma.done [#allocation6], 256
    $region33: #{tpu_custom_call.1} parent=1 // pred_fallthru
      _
    // Predicated region
    $region34: #{tpu_custom_call.1} parent=1 // pred_check
      _
    $region35: #{tpu_custom_call.1} parent=1 // pred_check_branch
      %74 = sbr.rel (0) target = $region37
    $region36: #{tpu_custom_call.1} parent=1 // pred_region
      %75 = dma.done [#allocation6], 512
    $region37: #{tpu_custom_call.1} parent=1 // pred_fallthru
      _
    // Predicated region
    $region38: #{tpu_custom_call.1} parent=1 // pred_check
      _
    $region39: #{tpu_custom_call.1} parent=1 // pred_check_branch
      %77 = sbr.rel (0) target = $region41
    $region40: #{tpu_custom_call.1} parent=1 // pred_region
      %78 = dma.done [#allocation9], 512
    $region41: #{tpu_custom_call.1} parent=1 // pred_fallthru
      _
    %v79 = vld [vmem:[%s5] sm:$0x1]
    %v80 = vld [vmem:[%s5 + $0x1] sm:$0x1]
    %v81 = vld [vmem:[%s5 + $0x2] sm:$0x1]
    %v82 = vld [vmem:[%s5 + $0x3] sm:$0x1]
    %v83 = vld [vmem:[%s5 + $0x4] sm:$0x1]
    %v84 = vld [vmem:[%s5 + $0x5] sm:$0x1]
    %v85 = vld [vmem:[%s5 + $0x6] sm:$0x1]
    %v86 = vld [vmem:[%s5 + $0x7] sm:$0x1]
    %v87 = vld [vmem:[%s5 + $0x8] sm:$0x1]
    %v88 = vld [vmem:[#allocation2] sm:$0xff]
    %v89 = vld [vmem:[#allocation2 + $0x8] sm:$0xff]
    %v90 = vld [vmem:[#allocation5] sm:$0xff]
    %v91 = vld [vmem:[#allocation5 + $0x8] sm:$0xff]
    %vm92 = vcmask 261120
    %v93 = vsel %vm92, %v88, 0.0
    %94 = vadd.xlane.f32.xlu0 %v93
    %v95 = vpop.xlane.xlu0 %94
    %v96 = vsel %vm92, %v89, 0.0
    %97 = vadd.xlane.f32.xlu0 %v96
    %v98 = vpop.xlane.xlu0 %97
    %v99 = vrcp.pop 32.0
    %v100 = vmul.f32 %v95, %v99
    %v101 = vmul.f32 %v98, %v99
    %v102 = vsub.f32 %v88, %v100
    %v103 = vsub.f32 %v89, %v101
    %v104 = vmul.f32 %v102, %v102
    %v105 = vmul.f32 %v103, %v103
    %v106 = vsel %vm92, %v104, 0.0
    %107 = vadd.xlane.f32.xlu0 %v106
    %v108 = vpop.xlane.xlu0 %107
    %v109 = vsel %vm92, %v105, 0.0
    %110 = vadd.xlane.f32.xlu0 %v109
    %v111 = vpop.xlane.xlu0 %110
    %v112 = vmul.f32 %v108, %v99
    %v113 = vmul.f32 %v111, %v99
    %v114 = vadd.f32 %v112, 1e-05
    %v115 = vadd.f32 %v113, 1e-05
    %v116 = vrsqrt.pop %v114
    %v117 = vrsqrt.pop %v115
    %v118 = vmul.f32 %v102, %v116
    %v119 = vmul.f32 %v103, %v117
    %v120 = vlaneseq
    %v121 = vshrl.u32 %v120, 7
    %v122 = vsub.s32 0, %v121
    %v123 = vrot.slane %v79, %v122
    %v124 = vmul.f32 %v118, %v123
    %v125 = vmul.f32 %v119, %v123
    %v126 = vlaneseq
    %v127 = vshrl.u32 %v126, 7
    %v128 = vsub.s32 0, %v127
    %v129 = vrot.slane %v80, %v128
    %v130 = vadd.f32 %v124, %v129
    %v131 = vadd.f32 %v125, %v129
    %v132 = vsel %vm92, %v90, 0.0
    %133 = vadd.xlane.f32.xlu0 %v132
    %v134 = vpop.xlane.xlu0 %133
    %v135 = vsel %vm92, %v91, 0.0
    %136 = vadd.xlane.f32.xlu0 %v135
    %v137 = vpop.xlane.xlu0 %136
    %v138 = vmul.f32 %v134, %v99
    %v139 = vmul.f32 %v137, %v99
    %v140 = vsub.f32 %v90, %v138
    %v141 = vsub.f32 %v91, %v139
    %v142 = vmul.f32 %v140, %v140
    %v143 = vmul.f32 %v141, %v141
    %v144 = vsel %vm92, %v142, 0.0
    %145 = vadd.xlane.f32.xlu0 %v144
    %v146 = vpop.xlane.xlu0 %145
    %v147 = vsel %vm92, %v143, 0.0
    %148 = vadd.xlane.f32.xlu0 %v147
    %v149 = vpop.xlane.xlu0 %148
    %v150 = vmul.f32 %v146, %v99
    %v151 = vmul.f32 %v149, %v99
    %v152 = vadd.f32 %v150, 1e-05
    %v153 = vadd.f32 %v151, 1e-05
    %v154 = vrsqrt.pop %v152
    %v155 = vrsqrt.pop %v153
    %v156 = vmul.f32 %v140, %v154
    %v157 = vmul.f32 %v141, %v155
    %v158 = vlaneseq
    %v159 = vshrl.u32 %v158, 7
    %v160 = vsub.s32 0, %v159
    %v161 = vrot.slane %v81, %v160
    %v162 = vmul.f32 %v156, %v161
    %v163 = vmul.f32 %v157, %v161
    %v164 = vlaneseq
    %v165 = vshrl.u32 %v164, 7
    %v166 = vsub.s32 0, %v165
    %v167 = vrot.slane %v82, %v166
    %v168 = vadd.f32 %v162, %v167
    %v169 = vadd.f32 %v163, %v167
    %v170 = vld [vmem:[#allocation7] sm:$0xff]
    %v171 = vld [vmem:[#allocation7 + $0x8] sm:$0xff]
    %v172 = vld [vmem:[#allocation7 + $0x10] sm:$0xff]
    %v173 = vld [vmem:[#allocation7 + $0x18] sm:$0xff]
    %v174 = vlaneseq
    %v175 = vshrl.u32 %v174, 7
    %v176 = vsub.s32 0, %v175
    %v177 = vrot.slane %v83, %v176
    %v179 = vsel %vm92, %v168, 0
    %v182 = vsel %vm92, %v169, 0
    %184 = vmatprep.subr.mxu0 0.0
    %185 = vmatpush1.msra.mxu0 %v170
    %186 = vmatprep.subr.mxu0 0.0
    %187 = vmatpush1.msra.mxu0 %v171
    %188 = vmatprep.subr.mxu0 0.0
    %189 = vmatpush1.msra.mxu0 %v172
    %190 = vmatprep.subr.mxu0 0.0
    %191 = vmatpush1.msra.mxu0 %v173
    %192 = vmatprep.subr.mxu0 0.0
    %193 = vmatpush1.msra.mxu0 0.0
    %194 = vmatprep.subr.mxu0 0.0
    %195 = vmatpush1.msra.mxu0 0.0
    %196 = vmatprep.subr.mxu0 0.0
    %197 = vmatpush1.msra.mxu0 0.0
    %198 = vmatprep.subr.mxu0 0.0
    %199 = vmatpush1.msra.mxu0 0.0
    %200 = vmatprep.subr.mxu0 0.0
    %201 = vmatpush1.msra.mxu0 0.0
    %202 = vmatprep.subr.mxu0 0.0
    %203 = vmatpush1.msra.mxu0 0.0
    %204 = vmatprep.subr.mxu0 0.0
    %205 = vmatpush1.msra.mxu0 0.0
    %206 = vmatprep.subr.mxu0 0.0
    %207 = vmatpush1.msra.mxu0 0.0
    %208 = vmatprep.subr.mxu0 0.0
    %209 = vmatpush1.msra.mxu0 0.0
    %210 = vmatprep.subr.mxu0 0.0
    %211 = vmatpush1.msra.mxu0 0.0
    %212 = vmatprep.subr.mxu0 0.0
    %213 = vmatpush1.msra.mxu0 0.0
    %214 = vmatprep.subr.mxu0 0.0
    %215 = vmatpush1.msra.mxu0 0.0
    %216 = vmatprep.subr.mxu0 0.0
    %217 = vmatpush1.msra.mxu0 0.0
    %218 = vmatprep.subr.mxu0 0.0
    %219 = vmatpush1.msra.mxu0 0.0
    %220 = vmatprep.subr.mxu0 0.0
    %221 = vmatpush1.msra.mxu0 0.0
    %222 = vmatprep.subr.mxu0 0.0
    %223 = vmatpush1.msra.mxu0 0.0
    %224 = vmatprep.subr.mxu0 0.0
    %225 = vmatpush1.msra.mxu0 0.0
    %226 = vmatprep.subr.mxu0 0.0
    %227 = vmatpush1.msra.mxu0 0.0
    %228 = vmatprep.subr.mxu0 0.0
    %229 = vmatpush1.msra.mxu0 0.0
    %230 = vmatprep.subr.mxu0 0.0
    %231 = vmatpush1.msra.mxu0 0.0
    %232 = vmatprep.subr.mxu0 0.0
    %233 = vmatpush1.msra.mxu0 0.0
    %234 = vmatprep.subr.mxu0 0.0
    %235 = vmatpush1.msra.mxu0 0.0
    %236 = vmatprep.subr.mxu0 0.0
    %237 = vmatpush1.msra.mxu0 0.0
    %238 = vmatprep.subr.mxu0 0.0
    %239 = vmatpush1.msra.mxu0 0.0
    %240 = vmatprep.subr.mxu0 0.0
    %241 = vmatpush1.msra.mxu0 0.0
    %242 = vmatprep.subr.mxu0 0.0
    %243 = vmatpush1.msra.mxu0 0.0
    %244 = vmatprep.subr.mxu0 0.0
    %245 = vmatpush1.msra.mxu0 0.0
    %246 = vmatprep.subr.mxu0 0.0
    %247 = vmatpush1.msra.mxu0 0.0
    %248 = vmatprep.mubr.f32.mxu0 0.0
    %249 = vmatmul.mubr.f32.gmra.mrb[0].mxu0 %v179
    %v250 = vpop.f32.mrb[0].mxu0
    %v251 = vadd.f32 %v177, %v250
    %v252 = vpop.f32.mrb[0].mxu0
    %253 = vmatprep.mubr.f32.mxu0 0.0
    %254 = vmatmul.mubr.f32.gmra.mrb[0].mxu0 %v182
    %v255 = vpop.f32.mrb[0].mxu0
    %v256 = vadd.f32 %v177, %v255
    %v257 = vpop.f32.mrb[0].mxu0
    %258 = vdwg.mxu0
    %v259 = vld [vmem:[#allocation8] sm:$0xff]
    %v260 = vld [vmem:[#allocation8 + $0x8] sm:$0xff]
    %v261 = vld [vmem:[#allocation8 + $0x10] sm:$0xff]
    %v262 = vld [vmem:[#allocation8 + $0x18] sm:$0xff]
    %v264 = vsel %vm92, %v130, 0
    %v267 = vsel %vm92, %v131, 0
    %269 = vmatprep.subr.mxu0 0.0
    %270 = vmatpush1.msra.mxu0 %v259
    %271 = vmatprep.subr.mxu0 0.0
    %272 = vmatpush1.msra.mxu0 %v260
    %273 = vmatprep.subr.mxu0 0.0
    %274 = vmatpush1.msra.mxu0 %v261
    %275 = vmatprep.subr.mxu0 0.0
    %276 = vmatpush1.msra.mxu0 %v262
    %277 = vmatprep.subr.mxu0 0.0
    %278 = vmatpush1.msra.mxu0 0.0
    %279 = vmatprep.subr.mxu0 0.0
    %280 = vmatpush1.msra.mxu0 0.0
    %281 = vmatprep.subr.mxu0 0.0
    %282 = vmatpush1.msra.mxu0 0.0
    %283 = vmatprep.subr.mxu0 0.0
    %284 = vmatpush1.msra.mxu0 0.0
    %285 = vmatprep.subr.mxu0 0.0
    %286 = vmatpush1.msra.mxu0 0.0
    %287 = vmatprep.subr.mxu0 0.0
    %288 = vmatpush1.msra.mxu0 0.0
    %289 = vmatprep.subr.mxu0 0.0
    %290 = vmatpush1.msra.mxu0 0.0
    %291 = vmatprep.subr.mxu0 0.0
    %292 = vmatpush1.msra.mxu0 0.0
    %293 = vmatprep.subr.mxu0 0.0
    %294 = vmatpush1.msra.mxu0 0.0
    %295 = vmatprep.subr.mxu0 0.0
    %296 = vmatpush1.msra.mxu0 0.0
    %297 = vmatprep.subr.mxu0 0.0
    %298 = vmatpush1.msra.mxu0 0.0
    %299 = vmatprep.subr.mxu0 0.0
    %300 = vmatpush1.msra.mxu0 0.0
    %301 = vmatprep.subr.mxu0 0.0
    %302 = vmatpush1.msra.mxu0 0.0
    %303 = vmatprep.subr.mxu0 0.0
    %304 = vmatpush1.msra.mxu0 0.0
    %305 = vmatprep.subr.mxu0 0.0
    %306 = vmatpush1.msra.mxu0 0.0
    %307 = vmatprep.subr.mxu0 0.0
    %308 = vmatpush1.msra.mxu0 0.0
    %309 = vmatprep.subr.mxu0 0.0
    %310 = vmatpush1.msra.mxu0 0.0
    %311 = vmatprep.subr.mxu0 0.0
    %312 = vmatpush1.msra.mxu0 0.0
    %313 = vmatprep.subr.mxu0 0.0
    %314 = vmatpush1.msra.mxu0 0.0
    %315 = vmatprep.subr.mxu0 0.0
    %316 = vmatpush1.msra.mxu0 0.0
    %317 = vmatprep.subr.mxu0 0.0
    %318 = vmatpush1.msra.mxu0 0.0
    %319 = vmatprep.subr.mxu0 0.0
    %320 = vmatpush1.msra.mxu0 0.0
    %321 = vmatprep.subr.mxu0 0.0
    %322 = vmatpush1.msra.mxu0 0.0
    %323 = vmatprep.subr.mxu0 0.0
    %324 = vmatpush1.msra.mxu0 0.0
    %325 = vmatprep.subr.mxu0 0.0
    %326 = vmatpush1.msra.mxu0 0.0
    %327 = vmatprep.subr.mxu0 0.0
    %328 = vmatpush1.msra.mxu0 0.0
    %329 = vmatprep.subr.mxu0 0.0
    %330 = vmatpush1.msra.mxu0 0.0
    %331 = vmatprep.subr.mxu0 0.0
    %332 = vmatpush1.msra.mxu0 0.0
    %333 = vmatprep.mubr.f32.mxu0 0.0
    %334 = vmatmul.mubr.f32.gmra.mrb[0].mxu0 %v264
    %v335 = vpop.f32.mrb[0].mxu0
    %v336 = vadd.f32 0.0, %v335
    %v337 = vpop.f32.mrb[0].mxu0
    %338 = vmatprep.mubr.f32.mxu0 0.0
    %339 = vmatmul.mubr.f32.gmra.mrb[0].mxu0 %v267
    %v340 = vpop.f32.mrb[0].mxu0
    %v341 = vadd.f32 0.0, %v340
    %v342 = vpop.f32.mrb[0].mxu0
    %343 = vdwg.mxu0
    %v344 = vlaneseq
    %v345 = vshrl.u32 %v344, 7
    %v346 = vsub.s32 0, %v345
    %v347 = vrot.slane %v84, %v346
    %v348 = vadd.f32 %v336, %v347
    %v349 = vadd.f32 %v341, %v347
    %v350 = vlaneseq
    %v351 = vshrl.u32 %v350, 7
    %v352 = vsub.s32 0, %v351
    %v353 = vrot.slane %v85, %v352
    %355 = vrot.lane.b32.xlu0 %v353, 32
    %v356 = vpop.permute.xlu0 %355
    %v358 = vadd.f32 %v336, %v356
    %v359 = vadd.f32 %v341, %v356
    %v361 = vsel %vm92, %v251, 0
    %v364 = vsel %vm92, %v348, 0
    %366 = vmatprep.subr.mxu0 0.0
    %367 = vmatpush1.xpose.msra.mxu0 %v364
    %368 = vmatprep.subr.mxu0 0.0
    %369 = vmatpush1.xpose.msra.mxu0 0.0
    %370 = vmatprep.subr.mxu0 0.0
    %371 = vmatpush1.xpose.msra.mxu0 0.0
    %372 = vmatprep.subr.mxu0 0.0
    %373 = vmatpush1.xpose.msra.mxu0 0.0
    %374 = vmatprep.subr.mxu0 0.0
    %375 = vmatpush1.xpose.msra.mxu0 0.0
    %376 = vmatprep.subr.mxu0 0.0
    %377 = vmatpush1.xpose.msra.mxu0 0.0
    %378 = vmatprep.subr.mxu0 0.0
    %379 = vmatpush1.xpose.msra.mxu0 0.0
    %380 = vmatprep.subr.mxu0 0.0
    %381 = vmatpush1.xpose.msra.mxu0 0.0
    %382 = vmatprep.subr.mxu0 0.0
    %383 = vmatpush1.xpose.msra.mxu0 0.0
    %384 = vmatprep.subr.mxu0 0.0
    %385 = vmatpush1.xpose.msra.mxu0 0.0
    %386 = vmatprep.subr.mxu0 0.0
    %387 = vmatpush1.xpose.msra.mxu0 0.0
    %388 = vmatprep.subr.mxu0 0.0
    %389 = vmatpush1.xpose.msra.mxu0 0.0
    %390 = vmatprep.subr.mxu0 0.0
    %391 = vmatpush1.xpose.msra.mxu0 0.0
    %392 = vmatprep.subr.mxu0 0.0
    %393 = vmatpush1.xpose.msra.mxu0 0.0
    %394 = vmatprep.subr.mxu0 0.0
    %395 = vmatpush1.xpose.msra.mxu0 0.0
    %396 = vmatprep.subr.mxu0 0.0
    %397 = vmatpush1.xpose.msra.mxu0 0.0
    %398 = vmatprep.subr.mxu0 0.0
    %399 = vmatpush1.xpose.msra.mxu0 0.0
    %400 = vmatprep.subr.mxu0 0.0
    %401 = vmatpush1.xpose.msra.mxu0 0.0
    %402 = vmatprep.subr.mxu0 0.0
    %403 = vmatpush1.xpose.msra.mxu0 0.0
    %404 = vmatprep.subr.mxu0 0.0
    %405 = vmatpush1.xpose.msra.mxu0 0.0
    %406 = vmatprep.subr.mxu0 0.0
    %407 = vmatpush1.xpose.msra.mxu0 0.0
    %408 = vmatprep.subr.mxu0 0.0
    %409 = vmatpush1.xpose.msra.mxu0 0.0
    %410 = vmatprep.subr.mxu0 0.0
    %411 = vmatpush1.xpose.msra.mxu0 0.0
    %412 = vmatprep.subr.mxu0 0.0
    %413 = vmatpush1.xpose.msra.mxu0 0.0
    %414 = vmatprep.subr.mxu0 0.0
    %415 = vmatpush1.xpose.msra.mxu0 0.0
    %416 = vmatprep.subr.mxu0 0.0
    %417 = vmatpush1.xpose.msra.mxu0 0.0
    %418 = vmatprep.subr.mxu0 0.0
    %419 = vmatpush1.xpose.msra.mxu0 0.0
    %420 = vmatprep.subr.mxu0 0.0
    %421 = vmatpush1.xpose.msra.mxu0 0.0
    %422 = vmatprep.subr.mxu0 0.0
    %423 = vmatpush1.xpose.msra.mxu0 0.0
    %424 = vmatprep.subr.mxu0 0.0
    %425 = vmatpush1.xpose.msra.mxu0 0.0
    %426 = vmatprep.subr.mxu0 0.0
    %427 = vmatpush1.xpose.msra.mxu0 0.0
    %428 = vmatprep.subr.mxu0 0.0
    %429 = vmatpush1.xpose.msra.mxu0 0.0
    %430 = vmatprep.mubr.f32.mxu0 0.0
    %431 = vmatmul.mubr.f32.gmra.mrb[0].mxu0 %v361
    %v432 = vpop.f32.mrb[0].mxu0
    %v433 = vadd.f32 0.0, %v432
    %v434 = vpop.f32.mrb[0].mxu0
    %435 = vdwg.mxu0
    %v437 = vsel %vm92, %v256, 0
    %v440 = vsel %vm92, %v349, 0
    %442 = vmatprep.subr.mxu0 0.0
    %443 = vmatpush1.xpose.msra.mxu0 %v440
    %444 = vmatprep.subr.mxu0 0.0
    %445 = vmatpush1.xpose.msra.mxu0 0.0
    %446 = vmatprep.subr.mxu0 0.0
    %447 = vmatpush1.xpose.msra.mxu0 0.0
    %448 = vmatprep.subr.mxu0 0.0
    %449 = vmatpush1.xpose.msra.mxu0 0.0
    %450 = vmatprep.subr.mxu0 0.0
    %451 = vmatpush1.xpose.msra.mxu0 0.0
    %452 = vmatprep.subr.mxu0 0.0
    %453 = vmatpush1.xpose.msra.mxu0 0.0
    %454 = vmatprep.subr.mxu0 0.0
    %455 = vmatpush1.xpose.msra.mxu0 0.0
    %456 = vmatprep.subr.mxu0 0.0
    %457 = vmatpush1.xpose.msra.mxu0 0.0
    %458 = vmatprep.subr.mxu0 0.0
    %459 = vmatpush1.xpose.msra.mxu0 0.0
    %460 = vmatprep.subr.mxu0 0.0
    %461 = vmatpush1.xpose.msra.mxu0 0.0
    %462 = vmatprep.subr.mxu0 0.0
    %463 = vmatpush1.xpose.msra.mxu0 0.0
    %464 = vmatprep.subr.mxu0 0.0
    %465 = vmatpush1.xpose.msra.mxu0 0.0
    %466 = vmatprep.subr.mxu0 0.0
    %467 = vmatpush1.xpose.msra.mxu0 0.0
    %468 = vmatprep.subr.mxu0 0.0
    %469 = vmatpush1.xpose.msra.mxu0 0.0
    %470 = vmatprep.subr.mxu0 0.0
    %471 = vmatpush1.xpose.msra.mxu0 0.0
    %472 = vmatprep.subr.mxu0 0.0
    %473 = vmatpush1.xpose.msra.mxu0 0.0
    %474 = vmatprep.subr.mxu0 0.0
    %475 = vmatpush1.xpose.msra.mxu0 0.0
    %476 = vmatprep.subr.mxu0 0.0
    %477 = vmatpush1.xpose.msra.mxu0 0.0
    %478 = vmatprep.subr.mxu0 0.0
    %479 = vmatpush1.xpose.msra.mxu0 0.0
    %480 = vmatprep.subr.mxu0 0.0
    %481 = vmatpush1.xpose.msra.mxu0 0.0
    %482 = vmatprep.subr.mxu0 0.0
    %483 = vmatpush1.xpose.msra.mxu0 0.0
    %484 = vmatprep.subr.mxu0 0.0
    %485 = vmatpush1.xpose.msra.mxu0 0.0
    %486 = vmatprep.subr.mxu0 0.0
    %487 = vmatpush1.xpose.msra.mxu0 0.0
    %488 = vmatprep.subr.mxu0 0.0
    %489 = vmatpush1.xpose.msra.mxu0 0.0
    %490 = vmatprep.subr.mxu0 0.0
    %491 = vmatpush1.xpose.msra.mxu0 0.0
    %492 = vmatprep.subr.mxu0 0.0
    %493 = vmatpush1.xpose.msra.mxu0 0.0
    %494 = vmatprep.subr.mxu0 0.0
    %495 = vmatpush1.xpose.msra.mxu0 0.0
    %496 = vmatprep.subr.mxu0 0.0
    %497 = vmatpush1.xpose.msra.mxu0 0.0
    %498 = vmatprep.subr.mxu0 0.0
    %499 = vmatpush1.xpose.msra.mxu0 0.0
    %500 = vmatprep.subr.mxu0 0.0
    %501 = vmatpush1.xpose.msra.mxu0 0.0
    %502 = vmatprep.subr.mxu0 0.0
    %503 = vmatpush1.xpose.msra.mxu0 0.0
    %504 = vmatprep.subr.mxu0 0.0
    %505 = vmatpush1.xpose.msra.mxu0 0.0
    %506 = vmatprep.mubr.f32.mxu0 0.0
    %507 = vmatmul.mubr.f32.gmra.mrb[0].mxu0 %v437
    %v508 = vpop.f32.mrb[0].mxu0
    %v509 = vadd.f32 0.0, %v508
    %v510 = vpop.f32.mrb[0].mxu0
    %511 = vdwg.mxu0
    %v512 = vld [vmem:[%s2] sm:$0x1]
    %v513 = vld [vmem:[%s2 + $0x1] sm:$0x1]
    %vm514 = vcmp.eq.f32.partialorder %v512, 0.0
    %vm515 = vcmp.eq.f32.partialorder %v513, 0.0
    %v516 = vsel %vm514, 1, 0
    %v517 = vsel %vm515, 1, 0
    %v518 = vlaneseq
    %v519 = vshrl.u32 %v518, 7
    %v520 = vsub.s32 0, %v519
    %v521 = vrot.slane %v516, %v520
    %v522 = vlaneseq
    %v523 = vshrl.u32 %v522, 7
    %v524 = vsub.s32 0, %v523
    %v525 = vrot.slane %v517, %v524
    %vm526 = vcmp.eq.s32.totalorder %v521, 1
    %vm527 = vcmp.eq.s32.totalorder %v525, 1
    %v528 = vsel %vm526, -1e+09, %v433
    %v529 = vsel %vm527, -1e+09, %v509
    %vm530 = vcmask 64512
    %v531 = vsel %vm530, %v528, -inf
    %532 = vmax.xlane.f32.xlu0 %v531
    %v533 = vpop.xlane.xlu0 %532
    %v534 = vsel %vm530, %v529, -inf
    %535 = vmax.xlane.f32.xlu0 %v534
    %v536 = vpop.xlane.xlu0 %535
    %v537 = vsub.f32 %v528, %v533
    %v538 = vsub.f32 %v529, %v536
    %v539 = vmul.f32 %v537, 1.442695
    %v540 = vpow.pop %v539
    %v541 = vmul.f32 %v538, 1.442695
    %v542 = vpow.pop %v541
    %v543 = vsel %vm530, %v540, 0.0
    %544 = vadd.xlane.f32.xlu0 %v543
    %v545 = vpop.xlane.xlu0 %544
    %v546 = vsel %vm530, %v542, 0.0
    %547 = vadd.xlane.f32.xlu0 %v546
    %v548 = vpop.xlane.xlu0 %547
    %v549 = vrcp.pop %v545
    %v550 = vmul.f32 %v540, %v549
    %v551 = vrcp.pop %v548
    %v552 = vmul.f32 %v542, %v551
    %v553 = vsub.f32 1.0, %v550
    %v554 = vsub.f32 1.0, %v552
    %v555 = vmul.f32 %v553, 1.442695
    %v556 = vpow.pop %v555
    %v557 = vmul.f32 %v554, 1.442695
    %v558 = vpow.pop %v557
    %v559 = vsel %vm530, %v556, 0.0
    %560 = vadd.xlane.f32.xlu0 %v559
    %v561 = vpop.xlane.xlu0 %560
    %v562 = vsel %vm530, %v558, 0.0
    %563 = vadd.xlane.f32.xlu0 %v562
    %v564 = vpop.xlane.xlu0 %563
    %v565 = vrcp.pop %v561
    %v566 = vmul.f32 %v556, %v565
    %v567 = vrcp.pop %v564
    %v568 = vmul.f32 %v558, %v567
    %570 = vrot.lane.b32.xlu0 %v358, 96
    %v571 = vpop.permute.xlu0 %570
    %v574 = vsel %vm530, %v566, 0
    %576 = vmatprep.subr.mxu0 0.0
    %577 = vmatpush1.msra.mxu0 %v571
    %578 = vmatprep.subr.mxu0 0.0
    %579 = vmatpush1.msra.mxu0 0.0
    %580 = vmatprep.subr.mxu0 0.0
    %581 = vmatpush1.msra.mxu0 0.0
    %582 = vmatprep.subr.mxu0 0.0
    %583 = vmatpush1.msra.mxu0 0.0
    %584 = vmatprep.subr.mxu0 0.0
    %585 = vmatpush1.msra.mxu0 0.0
    %586 = vmatprep.subr.mxu0 0.0
    %587 = vmatpush1.msra.mxu0 0.0
    %588 = vmatprep.subr.mxu0 0.0
    %589 = vmatpush1.msra.mxu0 0.0
    %590 = vmatprep.subr.mxu0 0.0
    %591 = vmatpush1.msra.mxu0 0.0
    %592 = vmatprep.subr.mxu0 0.0
    %593 = vmatpush1.msra.mxu0 0.0
    %594 = vmatprep.subr.mxu0 0.0
    %595 = vmatpush1.msra.mxu0 0.0
    %596 = vmatprep.subr.mxu0 0.0
    %597 = vmatpush1.msra.mxu0 0.0
    %598 = vmatprep.subr.mxu0 0.0
    %599 = vmatpush1.msra.mxu0 0.0
    %600 = vmatprep.subr.mxu0 0.0
    %601 = vmatpush1.msra.mxu0 0.0
    %602 = vmatprep.subr.mxu0 0.0
    %603 = vmatpush1.msra.mxu0 0.0
    %604 = vmatprep.subr.mxu0 0.0
    %605 = vmatpush1.msra.mxu0 0.0
    %606 = vmatprep.subr.mxu0 0.0
    %607 = vmatpush1.msra.mxu0 0.0
    %608 = vmatprep.subr.mxu0 0.0
    %609 = vmatpush1.msra.mxu0 0.0
    %610 = vmatprep.subr.mxu0 0.0
    %611 = vmatpush1.msra.mxu0 0.0
    %612 = vmatprep.subr.mxu0 0.0
    %613 = vmatpush1.msra.mxu0 0.0
    %614 = vmatprep.subr.mxu0 0.0
    %615 = vmatpush1.msra.mxu0 0.0
    %616 = vmatprep.subr.mxu0 0.0
    %617 = vmatpush1.msra.mxu0 0.0
    %618 = vmatprep.subr.mxu0 0.0
    %619 = vmatpush1.msra.mxu0 0.0
    %620 = vmatprep.subr.mxu0 0.0
    %621 = vmatpush1.msra.mxu0 0.0
    %622 = vmatprep.subr.mxu0 0.0
    %623 = vmatpush1.msra.mxu0 0.0
    %624 = vmatprep.subr.mxu0 0.0
    %625 = vmatpush1.msra.mxu0 0.0
    %626 = vmatprep.subr.mxu0 0.0
    %627 = vmatpush1.msra.mxu0 0.0
    %628 = vmatprep.subr.mxu0 0.0
    %629 = vmatpush1.msra.mxu0 0.0
    %630 = vmatprep.subr.mxu0 0.0
    %631 = vmatpush1.msra.mxu0 0.0
    %632 = vmatprep.subr.mxu0 0.0
    %633 = vmatpush1.msra.mxu0 0.0
    %634 = vmatprep.subr.mxu0 0.0
    %635 = vmatpush1.msra.mxu0 0.0
    %636 = vmatprep.subr.mxu0 0.0
    %637 = vmatpush1.msra.mxu0 0.0
    %638 = vmatprep.subr.mxu0 0.0
    %639 = vmatpush1.msra.mxu0 0.0
    %640 = vmatprep.mubr.f32.mxu0 0.0
    %641 = vmatmul.mubr.f32.gmra.mrb[0].mxu0 %v574
    %v642 = vpop.f32.mrb[0].mxu0
    %v643 = vadd.f32 0.0, %v642
    %v644 = vpop.f32.mrb[0].mxu0
    %645 = vdwg.mxu0
    %647 = vrot.lane.b32.xlu0 %v359, 96
    %v648 = vpop.permute.xlu0 %647
    %v651 = vsel %vm530, %v568, 0
    %653 = vmatprep.subr.mxu0 0.0
    %654 = vmatpush1.msra.mxu0 %v648
    %655 = vmatprep.subr.mxu0 0.0
    %656 = vmatpush1.msra.mxu0 0.0
    %657 = vmatprep.subr.mxu0 0.0
    %658 = vmatpush1.msra.mxu0 0.0
    %659 = vmatprep.subr.mxu0 0.0
    %660 = vmatpush1.msra.mxu0 0.0
    %661 = vmatprep.subr.mxu0 0.0
    %662 = vmatpush1.msra.mxu0 0.0
    %663 = vmatprep.subr.mxu0 0.0
    %664 = vmatpush1.msra.mxu0 0.0
    %665 = vmatprep.subr.mxu0 0.0
    %666 = vmatpush1.msra.mxu0 0.0
    %667 = vmatprep.subr.mxu0 0.0
    %668 = vmatpush1.msra.mxu0 0.0
    %669 = vmatprep.subr.mxu0 0.0
    %670 = vmatpush1.msra.mxu0 0.0
    %671 = vmatprep.subr.mxu0 0.0
    %672 = vmatpush1.msra.mxu0 0.0
    %673 = vmatprep.subr.mxu0 0.0
    %674 = vmatpush1.msra.mxu0 0.0
    %675 = vmatprep.subr.mxu0 0.0
    %676 = vmatpush1.msra.mxu0 0.0
    %677 = vmatprep.subr.mxu0 0.0
    %678 = vmatpush1.msra.mxu0 0.0
    %679 = vmatprep.subr.mxu0 0.0
    %680 = vmatpush1.msra.mxu0 0.0
    %681 = vmatprep.subr.mxu0 0.0
    %682 = vmatpush1.msra.mxu0 0.0
    %683 = vmatprep.subr.mxu0 0.0
    %684 = vmatpush1.msra.mxu0 0.0
    %685 = vmatprep.subr.mxu0 0.0
    %686 = vmatpush1.msra.mxu0 0.0
    %687 = vmatprep.subr.mxu0 0.0
    %688 = vmatpush1.msra.mxu0 0.0
    %689 = vmatprep.subr.mxu0 0.0
    %690 = vmatpush1.msra.mxu0 0.0
    %691 = vmatprep.subr.mxu0 0.0
    %692 = vmatpush1.msra.mxu0 0.0
    %693 = vmatprep.subr.mxu0 0.0
    %694 = vmatpush1.msra.mxu0 0.0
    %695 = vmatprep.subr.mxu0 0.0
    %696 = vmatpush1.msra.mxu0 0.0
    %697 = vmatprep.subr.mxu0 0.0
    %698 = vmatpush1.msra.mxu0 0.0
    %699 = vmatprep.subr.mxu0 0.0
    %700 = vmatpush1.msra.mxu0 0.0
    %701 = vmatprep.subr.mxu0 0.0
    %702 = vmatpush1.msra.mxu0 0.0
    %703 = vmatprep.subr.mxu0 0.0
    %704 = vmatpush1.msra.mxu0 0.0
    %705 = vmatprep.subr.mxu0 0.0
    %706 = vmatpush1.msra.mxu0 0.0
    %707 = vmatprep.subr.mxu0 0.0
    %708 = vmatpush1.msra.mxu0 0.0
    %709 = vmatprep.subr.mxu0 0.0
    %710 = vmatpush1.msra.mxu0 0.0
    %711 = vmatprep.subr.mxu0 0.0
    %712 = vmatpush1.msra.mxu0 0.0
    %713 = vmatprep.subr.mxu0 0.0
    %714 = vmatpush1.msra.mxu0 0.0
    %715 = vmatprep.subr.mxu0 0.0
    %716 = vmatpush1.msra.mxu0 0.0
    %717 = vmatprep.mubr.f32.mxu0 0.0
    %718 = vmatmul.mubr.f32.gmra.mrb[0].mxu0 %v651
    %v719 = vpop.f32.mrb[0].mxu0
    %v720 = vadd.f32 0.0, %v719
    %v721 = vpop.f32.mrb[0].mxu0
    %722 = vdwg.mxu0
    %v723 = vsel %vm92, %v643, 0.0
    %724 = vadd.xlane.f32.xlu0 %v723
    %v725 = vpop.xlane.xlu0 %724
    %v726 = vsel %vm92, %v720, 0.0
    %727 = vadd.xlane.f32.xlu0 %v726
    %v728 = vpop.xlane.xlu0 %727
    %v729 = vmul.f32 %v725, %v99
    %v730 = vmul.f32 %v728, %v99
    %v731 = vsub.f32 %v643, %v729
    %v732 = vsub.f32 %v720, %v730
    %v733 = vmul.f32 %v731, %v731
    %v734 = vmul.f32 %v732, %v732
    %v735 = vsel %vm92, %v733, 0.0
    %736 = vadd.xlane.f32.xlu0 %v735
    %v737 = vpop.xlane.xlu0 %736
    %v738 = vsel %vm92, %v734, 0.0
    %739 = vadd.xlane.f32.xlu0 %v738
    %v740 = vpop.xlane.xlu0 %739
    %v741 = vmul.f32 %v737, %v99
    %v742 = vmul.f32 %v740, %v99
    %v743 = vadd.f32 %v741, 1e-05
    %v744 = vadd.f32 %v742, 1e-05
    %v745 = vrsqrt.pop %v743
    %v746 = vrsqrt.pop %v744
    %v747 = vmul.f32 %v731, %v745
    %v748 = vmul.f32 %v732, %v746
    %v749 = vlaneseq
    %v750 = vshrl.u32 %v749, 7
    %v751 = vsub.s32 0, %v750
    %v752 = vrot.slane %v86, %v751
    %v753 = vmul.f32 %v747, %v752
    %v754 = vmul.f32 %v748, %v752
    %v755 = vlaneseq
    %v756 = vshrl.u32 %v755, 7
    %v757 = vsub.s32 0, %v756
    %v758 = vrot.slane %v87, %v757
    %v759 = vadd.f32 %v753, %v758
    %v760 = vadd.f32 %v754, %v758
    %761 = vst.msk [vmem:[#allocation10] sm:$0xff] %vm92, %v759
    %762 = vst.msk [vmem:[#allocation10 + $0x8] sm:$0xff] %vm92, %v760
    // Predicated region
    $region42: #{tpu_custom_call.1} parent=1 // pred_check
      _
    $region43: #{tpu_custom_call.1} parent=1 // pred_check_branch
      %764 = sbr.rel (0) target = $region45
    $region44: #{tpu_custom_call.1} parent=1 // pred_region
      %s766 = ssub.s32 256, 256
      %767 = vsyncadd [#allocation4], %s766
      %s768 = sshll.u32 [#allocation10], 4
      %s769 = int_to_ptr.vmem [resolvable:$true] %s768
      %774 = dma.vmem_to_hbm [thread:$0]  %s769, 256, %s6, [#allocation4], 128, 128, 8
    $region45: #{tpu_custom_call.1} parent=1 // pred_fallthru
      _
    // Predicated region
    $region46: #{tpu_custom_call.1} parent=1 // pred_check
      _
    $region47: #{tpu_custom_call.1} parent=1 // pred_check_branch
      %776 = sbr.rel (0) target = $region49
    $region48: #{tpu_custom_call.1} parent=1 // pred_region
      %777 = dma.done [#allocation4], 256
    $region49: #{tpu_custom_call.1} parent=1 // pred_fallthru
      _
    %778 = vsyncpa [#allocation3], 1
    %779 = vsyncpa [#allocation6], 1
    %780 = vsyncpa [#allocation9], 1
    %781 = vsyncpa [#allocation4], 1

</llo_original>
